<compile_context>
chip_gen: v6e
topology: v6e:2x2x1
jax: 0.10.0
libtpu: 0.0.40
codegen_flags: <defaults>
</compile_context>

<pallas_src>
import functools

import jax
import jax.numpy as jnp
from jax import lax
from jax.experimental import pallas as pl
from jax.experimental.pallas import tpu as pltpu

ALPHA = 0.5   # CrossEntropyFocalLoss(alpha=0.5)
GAMMA = 2.0   # MONAI FocalLoss default (sigmoid**2 rewrite below assumes gamma == 2)


def _pick_tile_lanes(batch, num_classes):
    """Batch (lane) tile: multiple of 128, ~<=1 MiB of f32 logits per tile, so the
    double-buffered inputs stay far below every chip's VMEM budget (incl. v7x's
    64 MiB physical / 32 MiB scoped default)."""
    elems_per_tile = 256 * 1024                       # ~1 MiB of f32 logits per tile
    tb = (elems_per_tile // max(num_classes, 1)) // 128 * 128
    tb = max(128, min(tb, 2048))
    return batch if batch <= tb else tb


def _ce_focal_kernel(x_ref, tgt_ref, out_ref, ce_acc, fl_acc, *, batch, num_classes):
    i = pl.program_id(0)
    nt = pl.num_programs(0)

    @pl.when(i == 0)
    def _init():
        ce_acc[...] = jnp.zeros_like(ce_acc)
        fl_acc[...] = jnp.zeros_like(fl_acc)

    x = x_ref[...].astype(jnp.float32)          # (C, TB): classes on sublanes, batch on lanes
    tgt = tgt_ref[...]                          # (1, TB) int32 class indices
    C, TB = x.shape

    # Mask padded lanes of the last (partial) tile; also sanitizes uninitialized VMEM.
    lane = lax.broadcasted_iota(jnp.int32, (1, TB), 1)
    valid = (i * TB + lane) < batch             # (1, TB) bool
    xs = jnp.where(valid, x, 0.0)               # (C, TB)

    # One-hot interaction computed once (boolean mask + single select).
    cls = lax.broadcasted_iota(jnp.int32, (C, TB), 0)
    onehot = cls == tgt                         # (C, TB) bool
    xo = jnp.where(onehot, xs, 0.0)             # x at the true class, 0 elsewhere

    # ---- CrossEntropyLoss: sum over samples of (logsumexp - x[target]) ----
    m = jnp.max(xs, axis=0, keepdims=True)                              # (1, TB)
    lse = m + jnp.log(jnp.sum(jnp.exp(xs - m), axis=0, keepdims=True))  # (1, TB)
    x_t = jnp.sum(xo, axis=0, keepdims=True)                            # (1, TB)
    ce_per = jnp.where(valid, lse - x_t, 0.0)
    ce_acc[...] += jnp.sum(ce_per, keepdims=True)

    # ---- MONAI sigmoid focal loss (gamma=2): sum over all (sample, class) elements ----
    # Share e = exp(-|x|) and l = log1p(e) across both log-sigmoid terms.
    e = jnp.exp(-jnp.abs(xs))
    l = jnp.log1p(e)
    # BCE-with-logits: max(x,0) - x*t + log1p(exp(-|x|))
    bce = jnp.maximum(xs, 0.0) - xo + l
    # z = x * (1 - 2*t); |z| == |x|, so sigmoid(z) reuses e.  exp(2*log_sigmoid(z)) == sigmoid(z)**2
    z = jnp.where(onehot, -xs, xs)
    sig = jnp.where(z >= 0, 1.0, e) / (1.0 + e)   # exact divide (pl.reciprocal(approx=True) would trade accuracy)
    fl_elem = jnp.where(valid, sig * sig * bce, 0.0)
    fl_acc[...] += jnp.sum(fl_elem, keepdims=True)

    @pl.when(i == nt - 1)
    def _finalize():
        ce_mean = ce_acc[...] * (1.0 / batch)
        fl_mean = fl_acc[...] * (1.0 / (batch * num_classes))
        out_ref[...] = ALPHA * ce_mean + (1.0 - ALPHA) * fl_mean


def cross_entropy_focal_loss(logits, target, *, tile_lanes=None):
    B, C = logits.shape
    # Lane-dense layout: batch on the (128-wide) lane axis, classes on the small leading axis.
    x_t = jnp.transpose(logits, (1, 0))                 # (C, B), original dtype (no f32 HBM copy)
    tgt2d = target.astype(jnp.int32).reshape(1, B)      # (1, B)

    TB = tile_lanes if tile_lanes is not None else _pick_tile_lanes(B, C)
    num_tiles = pl.cdiv(B, TB)
    # TODO(synk): very large class counts (C*TB*4B approaching VMEM) would need class-axis
    # tiling + two-pass logsumexp; not needed for classification-head sizes.

    kernel = functools.partial(_ce_focal_kernel, batch=B, num_classes=C)
    bytes_in = logits.size * logits.dtype.itemsize + B * 4
    cost = pl.CostEstimate(flops=15 * B * C, transcendentals=3 * B * C,
                           bytes_accessed=bytes_in + 4)

    out = pl.pallas_call(
        kernel,
        out_shape=jax.ShapeDtypeStruct((1, 1), jnp.float32),
        grid=(num_tiles,),
        in_specs=[
            pl.BlockSpec((C, TB), lambda i: (0, i)),
            pl.BlockSpec((1, TB), lambda i: (0, i)),
        ],
        out_specs=pl.BlockSpec((1, 1), lambda i: (0, 0)),
        scratch_shapes=[
            pltpu.VMEM((1, 1), jnp.float32),   # running CE sum
            pltpu.VMEM((1, 1), jnp.float32),   # running focal sum
        ],
        compiler_params=pltpu.CompilerParams(
            dimension_semantics=("arbitrary",),   # batch axis is a reduction (accumulators carried)
        ),
        cost_estimate=cost,
    )(x_t, tgt2d)
    return out[0, 0]


def _reference(logits, target):
    # pure-JAX reference of the same math for a correctness check
    x = logits.astype(jnp.float32)
    B, C = x.shape
    onehot = jax.nn.one_hot(target, C, dtype=jnp.float32)
    logp = jax.nn.log_softmax(x, axis=1)
    ce = -jnp.mean(jnp.sum(logp * onehot, axis=1))
    bce = x - x * onehot - jax.nn.log_sigmoid(x)
    invprobs = jax.nn.log_sigmoid(-x * (onehot * 2.0 - 1.0))
    focal = jnp.mean(jnp.exp(invprobs * GAMMA) * bce)
    return ALPHA * ce + (1.0 - ALPHA) * focal


if __name__ == "__main__":
    key = jax.random.PRNGKey(0)
    k1, k2, k3, k4 = jax.random.split(key, 4)

    # Small classification-head shapes (matches the original module's NC convention).
    B, C = 8, 4
    logits = jax.random.normal(k1, (B, C), dtype=jnp.float32)
    target = jax.random.randint(k2, (B,), 0, C, dtype=jnp.int32)

    loss = jax.block_until_ready(cross_entropy_focal_loss(logits, target))
    ref = _reference(logits, target)
    assert jnp.allclose(loss, ref, rtol=1e-5, atol=1e-5), (loss, ref)

    # Second case exercising the multi-tile path: 2 grid steps, last tile partial (masked lanes).
    B2, C2 = 200, 4
    logits2 = jax.random.normal(k3, (B2, C2), dtype=jnp.float32)
    target2 = jax.random.randint(k4, (B2,), 0, C2, dtype=jnp.int32)
    loss2 = jax.block_until_ready(cross_entropy_focal_loss(logits2, target2, tile_lanes=128))
    ref2 = _reference(logits2, target2)
    assert jnp.allclose(loss2, ref2, rtol=1e-5, atol=1e-5), (loss2, ref2)

    print("KERNEL_OK")
</pallas_src>

<mosaic_0001>
module attributes {stable_mosaic.version = 11 : i64} {
  func.func @_ce_focal_kernel(%arg0: i32, %arg1: memref<4x8xf32, #tpu.memory_space<vmem>>, %arg2: memref<1x8xi32, #tpu.memory_space<vmem>>, %arg3: memref<1x1xf32, #tpu.memory_space<vmem>>, %arg4: memref<1x1xf32, #tpu.memory_space<vmem>>, %arg5: memref<1x1xf32, #tpu.memory_space<vmem>>) attributes {dimension_semantics = [#tpu.dimension_semantics<arbitrary>], iteration_bounds = array<i64: 1>, scalar_prefetch = 0 : i64, scratch_operands = 2 : i64, tpu.core_type = #tpu.core_type<tc>, window_params = [{transform_indices = @transform_0, window_bounds = array<i64: 4, 8>}, {transform_indices = @transform_1, window_bounds = array<i64: 1, 8>}, {pipeline_mode = #tpu.pipeline_mode<synchronous>, transform_indices = @transform_2, window_bounds = array<i64: 1, 1>}]} {
    %c0_i32 = arith.constant 0 : i32
    %0 = arith.cmpi eq, %arg0, %c0_i32 : i32
    %1 = arith.extui %0 : i1 to i32
    %c0_i32_0 = arith.constant 0 : i32
    %2 = arith.cmpi ne, %1, %c0_i32_0 : i32
    scf.if %2 {
      %cst_29 = arith.constant 0.000000e+00 : f32
      %78 = vector.broadcast %cst_29 : f32 to vector<1x1xf32>
      %c0_30 = arith.constant 0 : index
      %c0_31 = arith.constant 0 : index
      %79 = vector.load %arg4[%c0_30, %c0_31] : memref<1x1xf32, #tpu.memory_space<vmem>>, vector<1x1xf32>
      tpu.vector_store %arg4[%c0_30, %c0_31], %78 {strides = array<i32>} : memref<1x1xf32, #tpu.memory_space<vmem>>, vector<1x1xf32>,
      %cst_32 = arith.constant 0.000000e+00 : f32
      %80 = vector.broadcast %cst_32 : f32 to vector<1x1xf32>
      %c0_33 = arith.constant 0 : index
      %c0_34 = arith.constant 0 : index
      %81 = vector.load %arg5[%c0_33, %c0_34] : memref<1x1xf32, #tpu.memory_space<vmem>>, vector<1x1xf32>
      tpu.vector_store %arg5[%c0_33, %c0_34], %80 {strides = array<i32>} : memref<1x1xf32, #tpu.memory_space<vmem>>, vector<1x1xf32>,
    } else {
    }
    %c0 = arith.constant 0 : index
    %c0_1 = arith.constant 0 : index
    %3 = vector.load %arg1[%c0, %c0_1] : memref<4x8xf32, #tpu.memory_space<vmem>>, vector<4x8xf32>
    %c0_2 = arith.constant 0 : index
    %c0_3 = arith.constant 0 : index
    %4 = vector.load %arg2[%c0_2, %c0_3] : memref<1x8xi32, #tpu.memory_space<vmem>>, vector<1x8xi32>
    %5 = tpu.iota {dimensions = array<i32: 1>} : vector<1x8xi32>
    %c8_i32 = arith.constant 8 : i32
    %6 = arith.muli %arg0, %c8_i32 : i32
    %7 = vector.broadcast %6 : i32 to vector<1x8xi32>
    %8 = arith.addi %7, %5 : vector<1x8xi32>
    %c8_i32_4 = arith.constant 8 : i32
    %9 = vector.broadcast %c8_i32_4 : i32 to vector<1x8xi32>
    %10 = arith.cmpi slt, %8, %9 : vector<1x8xi32>
    %cst = arith.constant 0.000000e+00 : f32
    %11 = vector.shape_cast %10 : vector<1x8xi1> to vector<1x8xi1>
    %12 = vector.broadcast %11 : vector<1x8xi1> to vector<4x8xi1>
    %13 = vector.broadcast %cst : f32 to vector<4x8xf32>
    %14 = arith.select %12, %3, %13 : vector<4x8xi1>, vector<4x8xf32>
    %15 = tpu.iota {dimensions = array<i32: 0>} : vector<4x8xi32>
    %16 = vector.broadcast %4 : vector<1x8xi32> to vector<4x8xi32>
    %17 = arith.cmpi eq, %15, %16 : vector<4x8xi32>
    %cst_5 = arith.constant 0.000000e+00 : f32
    %18 = vector.broadcast %cst_5 : f32 to vector<4x8xf32>
    %19 = arith.select %17, %14, %18 : vector<4x8xi1>, vector<4x8xf32>
    %cst_6 = arith.constant dense<0xFF800000> : vector<8xf32>
    %20 = vector.multi_reduction <maximumf>, %14, %cst_6 [0] : vector<4x8xf32> to vector<8xf32>
    %21 = vector.shape_cast %20 : vector<8xf32> to vector<1x8xf32>
    %22 = vector.broadcast %21 : vector<1x8xf32> to vector<4x8xf32>
    %23 = arith.subf %14, %22 : vector<4x8xf32>
    %24 = math.exp %23 : vector<4x8xf32>
    %cst_7 = arith.constant dense<0.000000e+00> : vector<8xf32>
    %25 = vector.multi_reduction <add>, %24, %cst_7 [0] : vector<4x8xf32> to vector<8xf32>
    %26 = vector.shape_cast %25 : vector<8xf32> to vector<1x8xf32>
    %27 = math.log %26 : vector<1x8xf32>
    %28 = arith.addf %21, %27 : vector<1x8xf32>
    %cst_8 = arith.constant dense<0.000000e+00> : vector<8xf32>
    %29 = vector.multi_reduction <add>, %19, %cst_8 [0] : vector<4x8xf32> to vector<8xf32>
    %30 = vector.shape_cast %29 : vector<8xf32> to vector<1x8xf32>
    %31 = arith.subf %28, %30 : vector<1x8xf32>
    %cst_9 = arith.constant 0.000000e+00 : f32
    %32 = vector.broadcast %cst_9 : f32 to vector<1x8xf32>
    %33 = arith.select %10, %31, %32 : vector<1x8xi1>, vector<1x8xf32>
    %c0_10 = arith.constant 0 : index
    %c0_11 = arith.constant 0 : index
    %34 = vector.load %arg4[%c0_10, %c0_11] : memref<1x1xf32, #tpu.memory_space<vmem>>, vector<1x1xf32>
    %35 = vector.shape_cast %33 : vector<1x8xf32> to vector<1x1x8xf32>
    %cst_12 = arith.constant dense<0.000000e+00> : vector<1xf32>
    %36 = vector.multi_reduction <add>, %35, %cst_12 [1, 2] : vector<1x1x8xf32> to vector<1xf32>
    %37 = vector.shape_cast %36 : vector<1xf32> to vector<1x1x1xf32>
    %38 = vector.extract %37[0, 0, 0] : f32 from vector<1x1x1xf32>
    %39 = vector.broadcast %38 : f32 to vector<1x1xf32>
    %40 = arith.addf %34, %39 : vector<1x1xf32>
    %c0_13 = arith.constant 0 : index
    %c0_14 = arith.constant 0 : index
    %41 = vector.load %arg4[%c0_13, %c0_14] : memref<1x1xf32, #tpu.memory_space<vmem>>, vector<1x1xf32>
    tpu.vector_store %arg4[%c0_13, %c0_14], %40 {strides = array<i32>} : memref<1x1xf32, #tpu.memory_space<vmem>>, vector<1x1xf32>,
    %42 = math.absf %14 : vector<4x8xf32>
    %cst_15 = arith.constant 0.000000e+00 : f32
    %43 = vector.broadcast %cst_15 : f32 to vector<4x8xf32>
    %44 = arith.subf %43, %42 : vector<4x8xf32>
    %45 = math.exp %44 : vector<4x8xf32>
    %46 = math.log1p %45 : vector<4x8xf32>
    %cst_16 = arith.constant 0.000000e+00 : f32
    %47 = vector.broadcast %cst_16 : f32 to vector<4x8xf32>
    %48 = arith.maximumf %14, %47 : vector<4x8xf32>
    %49 = arith.subf %48, %19 : vector<4x8xf32>
    %50 = arith.addf %49, %46 : vector<4x8xf32>
    %cst_17 = arith.constant 0.000000e+00 : f32
    %51 = vector.broadcast %cst_17 : f32 to vector<4x8xf32>
    %52 = arith.subf %51, %14 : vector<4x8xf32>
    %53 = arith.select %17, %52, %14 : vector<4x8xi1>, vector<4x8xf32>
    %cst_18 = arith.constant 0.000000e+00 : f32
    %54 = vector.broadcast %cst_18 : f32 to vector<4x8xf32>
    %55 = arith.cmpf oge, %53, %54 : vector<4x8xf32>
    %cst_19 = arith.constant 1.000000e+00 : f32
    %56 = vector.broadcast %cst_19 : f32 to vector<4x8xf32>
    %57 = arith.select %55, %56, %45 : vector<4x8xi1>, vector<4x8xf32>
    %cst_20 = arith.constant 1.000000e+00 : f32
    %58 = vector.broadcast %cst_20 : f32 to vector<4x8xf32>
    %59 = arith.addf %58, %45 : vector<4x8xf32>
    %60 = arith.divf %57, %59 : vector<4x8xf32>
    %61 = arith.mulf %60, %60 : vector<4x8xf32>
    %62 = arith.mulf %61, %50 : vector<4x8xf32>
    %cst_21 = arith.constant 0.000000e+00 : f32
    %63 = vector.shape_cast %10 : vector<1x8xi1> to vector<1x8xi1>
    %64 = vector.broadcast %63 : vector<1x8xi1> to vector<4x8xi1>
    %65 = vector.broadcast %cst_21 : f32 to vector<4x8xf32>
    %66 = arith.select %64, %62, %65 : vector<4x8xi1>, vector<4x8xf32>
    %c0_22 = arith.constant 0 : index
    %c0_23 = arith.constant 0 : index
    %67 = vector.load %arg5[%c0_22, %c0_23] : memref<1x1xf32, #tpu.memory_space<vmem>>, vector<1x1xf32>
    %68 = vector.shape_cast %66 : vector<4x8xf32> to vector<1x4x8xf32>
    %cst_24 = arith.constant dense<0.000000e+00> : vector<1xf32>
    %69 = vector.multi_reduction <add>, %68, %cst_24 [1, 2] : vector<1x4x8xf32> to vector<1xf32>
    %70 = vector.shape_cast %69 : vector<1xf32> to vector<1x1x1xf32>
    %71 = vector.extract %70[0, 0, 0] : f32 from vector<1x1x1xf32>
    %72 = vector.broadcast %71 : f32 to vector<1x1xf32>
    %73 = arith.addf %67, %72 : vector<1x1xf32>
    %c0_25 = arith.constant 0 : index
    %c0_26 = arith.constant 0 : index
    %74 = vector.load %arg5[%c0_25, %c0_26] : memref<1x1xf32, #tpu.memory_space<vmem>>, vector<1x1xf32>
    tpu.vector_store %arg5[%c0_25, %c0_26], %73 {strides = array<i32>} : memref<1x1xf32, #tpu.memory_space<vmem>>, vector<1x1xf32>,
    %c0_i32_27 = arith.constant 0 : i32
    %75 = arith.cmpi eq, %arg0, %c0_i32_27 : i32
    %76 = arith.extui %75 : i1 to i32
    %c0_i32_28 = arith.constant 0 : i32
    %77 = arith.cmpi ne, %76, %c0_i32_28 : i32
    scf.if %77 {
      %c0_29 = arith.constant 0 : index
      %c0_30 = arith.constant 0 : index
      %78 = vector.load %arg4[%c0_29, %c0_30] : memref<1x1xf32, #tpu.memory_space<vmem>>, vector<1x1xf32>
      %cst_31 = arith.constant 1.250000e-01 : f32
      %79 = vector.broadcast %cst_31 : f32 to vector<1x1xf32>
      %80 = arith.mulf %78, %79 : vector<1x1xf32>
      %c0_32 = arith.constant 0 : index
      %c0_33 = arith.constant 0 : index
      %81 = vector.load %arg5[%c0_32, %c0_33] : memref<1x1xf32, #tpu.memory_space<vmem>>, vector<1x1xf32>
      %cst_34 = arith.constant 3.125000e-02 : f32
      %82 = vector.broadcast %cst_34 : f32 to vector<1x1xf32>
      %83 = arith.mulf %81, %82 : vector<1x1xf32>
      %cst_35 = arith.constant 5.000000e-01 : f32
      %84 = vector.broadcast %cst_35 : f32 to vector<1x1xf32>
      %85 = arith.mulf %84, %80 : vector<1x1xf32>
      %cst_36 = arith.constant 5.000000e-01 : f32
      %86 = vector.broadcast %cst_36 : f32 to vector<1x1xf32>
      %87 = arith.mulf %86, %83 : vector<1x1xf32>
      %88 = arith.addf %85, %87 : vector<1x1xf32>
      %c0_37 = arith.constant 0 : index
      %c0_38 = arith.constant 0 : index
      %89 = vector.load %arg3[%c0_37, %c0_38] : memref<1x1xf32, #tpu.memory_space<vmem>>, vector<1x1xf32>
      tpu.vector_store %arg3[%c0_37, %c0_38], %88 {strides = array<i32>} : memref<1x1xf32, #tpu.memory_space<vmem>>, vector<1x1xf32>,
    } else {
    }
    return
  }
  func.func @transform_0(%arg0: i32) -> (i32, i32) {
    %c0_i32 = arith.constant 0 : i32
    %c0_i32_0 = arith.constant 0 : i32
    return %c0_i32, %arg0 : i32, i32
  }
  func.func @transform_1(%arg0: i32) -> (i32, i32) {
    %c0_i32 = arith.constant 0 : i32
    %c0_i32_0 = arith.constant 0 : i32
    return %c0_i32, %arg0 : i32, i32
  }
  func.func @transform_2(%arg0: i32) -> (i32, i32) {
    %c0_i32 = arith.constant 0 : i32
    %c0_i32_0 = arith.constant 0 : i32
    %c0_i32_1 = arith.constant 0 : i32
    return %c0_i32, %c0_i32_0 : i32, i32
  }
}

</mosaic_0001>

<llo_original>
// kernel: tpu_custom_call.1
$region0: #{tpu_custom_call.1}
  #allocation0 [shape = 'u32[]', space=smem, size = 0x4, offset = 0x4, fixed_abs, tag = 'smem constant byte address 0x4 - core index']
  #allocation1 [shape = 'u32[144,128]{1,0:T(1,128)}', space=vmem, size = 0x12000, scoped, tag = 'internal scratch']
  #allocation2 [shape = 'f32[1,1]{1,0:T(1,128)}', space=vmem, size = 0x200, scoped, tag = 'scratch operand']
  #allocation3 [shape = 'f32[1,1]{1,0:T(1,128)}', space=vmem, size = 0x200, scoped, tag = 'scratch operand']
  %s0 = inlined_call_operand.hbm [shape: f32[4,8], index: 0, kind: input, shape index: {}]
  %s1 = inlined_call_operand.vmem [shape: s32[1,8], index: 1, kind: input, shape index: {}]
  %s2 = inlined_call_operand.hbm [shape: f32[1,1], index: 2, kind: output, shape index: {}]
  %s3 = sld [smem:[#allocation0]]
  $region30: #{tpu_custom_call.1} parent=0
    _
  %s5 = ssub.s32 1, %s3
  %s6 = scalar_select 0, %s5, %s3
  $region1: #{tpu_custom_call.1} parent=0
    #allocation4 [shape = 'u8[2048]{0}', space=vmem, size = 0x800, scoped, tag = 'input window, operand 0, single buffered']
    #allocation5 [shape = 's32[1]{0}', space=sflag, size = 0x4, scoped, tag = 'scoped memory for tpu_custom_call.1']
    #allocation6 [shape = 's32[1]{0}', space=sflag, size = 0x4, scoped, tag = 'scoped memory for tpu_custom_call.1']
    #allocation7 [shape = 'u8[512]{0}', space=vmem, size = 0x400, scoped, tag = 'output window, operand 0, single buffered']
    %7 = vsyncpa [#allocation5], 0
    %8 = vsyncpa [#allocation6], 0
    // Predicated region
    $region2: #{tpu_custom_call.1} parent=1 // pred_check
      _
    $region3: #{tpu_custom_call.1} parent=1 // pred_check_branch
      %10 = sbr.rel (0) target = $region5
    $region4: #{tpu_custom_call.1} parent=1 // pred_region
      %s12 = ssub.s32 64, 64
      %13 = vsyncadd [#allocation5], %s12
      %s15 = sshll.u32 [#allocation4], 4
      %s16 = int_to_ptr.vmem [resolvable:$true] %s15
      %18 = dma.hbm_to_vmem [thread:$0]  %s0, 64, %s16, [#allocation5]
    $region5: #{tpu_custom_call.1} parent=1 // pred_fallthru
      _
    // Predicated region
    $region6: #{tpu_custom_call.1} parent=1 // pred_check
      _
    $region7: #{tpu_custom_call.1} parent=1 // pred_check_branch
      %20 = sbr.rel (0) target = $region9
    $region8: #{tpu_custom_call.1} parent=1 // pred_region
      _
    $region9: #{tpu_custom_call.1} parent=1 // pred_fallthru
      _
    // Predicated region
    $region10: #{tpu_custom_call.1} parent=1 // pred_check
      _
    $region11: #{tpu_custom_call.1} parent=1 // pred_check_branch
      %22 = sbr.rel (0) target = $region13
    $region12: #{tpu_custom_call.1} parent=1 // pred_region
      %23 = dma.done [#allocation5], 64
    $region13: #{tpu_custom_call.1} parent=1 // pred_fallthru
      _
    %p24 = scmp.eq.s32.totalorder 0, 0
    // Predicated region
    $region14: #{tpu_custom_call.1} parent=1 // pred_check
      %p25 = pneg %p24
    $region15: #{tpu_custom_call.1} parent=1 // pred_check_branch
      %27 = sbr.rel (%p25) target = $region17
    $region16: #{tpu_custom_call.1} parent=1 // pred_region
      %vm28 = vcmask 0
      %29 = vst.msk [vmem:[#allocation2] sm:$0x1] %vm28, 0.0
      %30 = vst.msk [vmem:[#allocation3] sm:$0x1] %vm28, 0.0
    $region17: #{tpu_custom_call.1} parent=1 // pred_fallthru
      _
    %v31 = vld [vmem:[#allocation4] sm:$0xf]
    %v32 = vld [vmem:[%s1] sm:$0x1]
    %v33 = vlaneseq
    %v34 = vand.u32 %v33, 127
    %s35 = smul.u32 0, 8
    %v36 = vstv %s35
    %v37 = vadd.s32 %v36, %v34
    %vm38 = vcmp.lt.s32.totalorder %v37, 8
    %v39 = vsel %vm38, 1, 0
    %vm40 = vcmp.eq.s32.totalorder %v39, 1
    %v41 = vsel %vm40, %v31, 0.0
    %v42 = vlaneseq
    %v43 = vshrl.u32 %v42, 7
    %v44 = vlaneseq
    %v45 = vshrl.u32 %v44, 7
    %v46 = vsub.s32 0, %v45
    %v47 = vrot.slane %v32, %v46
    %vm48 = vcmp.eq.s32.totalorder %v43, %v47
    %v49 = vsel %vm48, %v41, 0.0
    %vm50 = vcmask 60416
    %v51 = vsel %vm50, %v41, -inf
    %v52 = vrot.slane %v51, 4
    %v53 = vmax.f32 %v51, %v52
    %v54 = vrot.slane %v53, 2
    %v55 = vmax.f32 %v53, %v54
    %v56 = vrot.slane %v55, 1
    %v57 = vmax.f32 %v55, %v56
    %v58 = vsub.f32 %v41, %v57
    %v59 = vmul.f32 %v58, 1.442695
    %v60 = vpow.pop %v59
    %v61 = vsel %vm50, %v60, 0.0
    %v62 = vrot.slane %v61, 4
    %v63 = vadd.f32 %v61, %v62
    %v64 = vrot.slane %v63, 2
    %v65 = vadd.f32 %v63, %v64
    %v66 = vrot.slane %v65, 1
    %v67 = vadd.f32 %v65, %v66
    %v68 = vlog2.pop %v67
    %v69 = vmul.f32 %v68, 0.6931472
    %v70 = vadd.f32 %v57, %v69
    %v71 = vsel %vm50, %v49, 0.0
    %v72 = vrot.slane %v71, 4
    %v73 = vadd.f32 %v71, %v72
    %v74 = vrot.slane %v73, 2
    %v75 = vadd.f32 %v73, %v74
    %v76 = vrot.slane %v75, 1
    %v77 = vadd.f32 %v75, %v76
    %v78 = vsub.f32 %v70, %v77
    %v79 = vsel %vm38, %v78, 0.0
    %v80 = vld [vmem:[#allocation2] sm:$0x1]
    %vm81 = vcmask 57344
    %v82 = vsel %vm81, %v79, 0.0
    %83 = vadd.xlane.f32.xlu0 %v82
    %v84 = vpop.xlane.xlu0 %83
    %v85 = vrot.slane %v84, 4
    %v86 = vadd.f32 %v84, %v85
    %v87 = vrot.slane %v86, 2
    %v88 = vadd.f32 %v86, %v87
    %v89 = vrot.slane %v88, 1
    %v90 = vadd.f32 %v88, %v89
    %s91 = vtos %v90
    %v92 = vstv %s91
    %v93 = vadd.f32 %v80, %v92
    %vm94 = vcmask 0
    %95 = vst.msk [vmem:[#allocation2] sm:$0x1] %vm94, %v93
    %v96 = vand.u32 2147483647, %v41
    %v97 = vsub.f32 0.0, %v96
    %v98 = vmul.f32 %v97, 1.442695
    %v99 = vpow.pop %v98
    %v100 = vadd.f32 %v99, 1.0
    %v101 = vlog2.pop %v100
    %v102 = vmul.f32 %v101, 0.6931472
    %v103 = vmul.f32 -0.5, %v99
    %v104 = vadd.f32 %v103, 1.0
    %v105 = vmul.f32 %v104, %v99
    %v106 = vand.u32 2147483647, %v99
    %vm107 = vcmp.lt.f32.partialorder %v106, 0.0004427343
    %v108 = vsel %vm107, %v105, %v102
    %v109 = vmax.f32 %v41, 0.0
    %v110 = vsub.f32 %v109, %v49
    %v111 = vadd.f32 %v110, %v108
    %v112 = vsub.f32 0.0, %v41
    %v113 = vsel %vm48, %v112, %v41
    %vm114 = vcmp.ge.f32.partialorder %v113, 0.0
    %v115 = vsel %vm114, 1.0, %v99
    %v116 = vadd.f32 %v99, 1.0
    %v117 = vrcp.pop %v116
    %v118 = vmul.f32 %v115, %v117
    %v119 = vmul.f32 %v118, %v118
    %v120 = vmul.f32 %v119, %v111
    %v121 = vsel %vm40, %v120, 0.0
    %v122 = vld [vmem:[#allocation3] sm:$0x1]
    %v123 = vsel %vm50, %v121, 0.0
    %124 = vadd.xlane.f32.xlu0 %v123
    %v125 = vpop.xlane.xlu0 %124
    %v126 = vrot.slane %v125, 4
    %v127 = vadd.f32 %v125, %v126
    %v128 = vrot.slane %v127, 2
    %v129 = vadd.f32 %v127, %v128
    %v130 = vrot.slane %v129, 1
    %v131 = vadd.f32 %v129, %v130
    %s132 = vtos %v131
    %v133 = vstv %s132
    %v134 = vadd.f32 %v122, %v133
    %135 = vst.msk [vmem:[#allocation3] sm:$0x1] %vm94, %v134
    // Predicated region
    $region18: #{tpu_custom_call.1} parent=1 // pred_check
      %p136 = pneg %p24
    $region19: #{tpu_custom_call.1} parent=1 // pred_check_branch
      %138 = sbr.rel (%p136) target = $region21
    $region20: #{tpu_custom_call.1} parent=1 // pred_region
      %v139 = vld [vmem:[#allocation2] sm:$0x1]
      %v140 = vmul.f32 %v139, 0.125
      %v141 = vld [vmem:[#allocation3] sm:$0x1]
      %v142 = vmul.f32 %v141, 0.03125
      %v143 = vmul.f32 %v140, 0.5
      %v144 = vmul.f32 %v142, 0.5
      %v145 = vadd.f32 %v143, %v144
      %146 = vst.msk [vmem:[#allocation7] sm:$0x1] %vm94, %v145
    $region21: #{tpu_custom_call.1} parent=1 // pred_fallthru
      _
    // Predicated region
    $region22: #{tpu_custom_call.1} parent=1 // pred_check
      _
    $region23: #{tpu_custom_call.1} parent=1 // pred_check_branch
      %148 = sbr.rel (0) target = $region25
    $region24: #{tpu_custom_call.1} parent=1 // pred_region
      %s150 = ssub.s32 16, 16
      %151 = vsyncadd [#allocation6], %s150
      %s153 = sshll.u32 [#allocation7], 4
      %s154 = int_to_ptr.vmem [resolvable:$true] %s153
      %156 = dma.vmem_to_hbm [thread:$0]  %s154, 16, %s2, [#allocation6]
    $region25: #{tpu_custom_call.1} parent=1 // pred_fallthru
      _
    // Predicated region
    $region26: #{tpu_custom_call.1} parent=1 // pred_check
      _
    $region27: #{tpu_custom_call.1} parent=1 // pred_check_branch
      %158 = sbr.rel (0) target = $region29
    $region28: #{tpu_custom_call.1} parent=1 // pred_region
      %159 = dma.done [#allocation6], 16
    $region29: #{tpu_custom_call.1} parent=1 // pred_fallthru
      _
    %160 = vsyncpa [#allocation5], 1
    %161 = vsyncpa [#allocation6], 1

</llo_original>
